<compile_context>
chip_gen: v5e
topology: v5e:2x2
jax: 0.10.0
libtpu: 0.0.40
codegen_flags: <defaults>
</compile_context>

<pallas_src>
import functools

import jax
import jax.numpy as jnp
from jax.experimental import pallas as pl
from jax.experimental.pallas import tpu as pltpu


def _normalize_clip_kernel(x_ref, mean_ref, var_ref, o_ref, *, clip_range, epsilon):
    x = x_ref[...]                                   # (tb, D)
    mean = mean_ref[...]                             # (1, D)  broadcasts over batch
    # One reciprocal per column instead of one divide per element.
    inv_std = pl.reciprocal(jnp.sqrt(var_ref[...]) + epsilon, approx=False)  # (1, D)
    normalized = (x - mean) * inv_std
    o_ref[...] = jnp.clip(normalized, -clip_range, clip_range).astype(o_ref.dtype)


def _pick_tile_b(B, D):
    """Batch tile: multiple of 8, VMEM-safe on all generations, <=1024 rows."""
    if B <= 8:
        return B
    # in-block + out-block, each double-buffered, f32: 2 * 2 * tile_b * D * 4 bytes.
    budget_bytes = 8 * 1024 * 1024      # conservative even for v7x's 32 MiB scoped VMEM
    max_rows = budget_bytes // (2 * 2 * D * 4)
    max_rows = min(max_rows, 1024, B)
    max_rows = max(8, (max_rows // 8) * 8)
    return min(max_rows, B)


def normalize_and_clip(x, mean, var, clip_range=10.0, epsilon=1e-8, tile_b=None):
    """Pallas TPU implementation of NormalizeAndClip.forward (eval mode).

    x:    (B, D) float32
    mean: (D,)   float32 buffer
    var:  (D,)   float32 buffer
    """
    assert x.ndim == 2, f"Expected 2-D input, got {x.ndim}-D"
    B, D = x.shape
    out_dtype = x.dtype
    xf32 = x.astype(jnp.float32)
    mean1 = jnp.asarray(mean, jnp.float32).reshape(-1)
    var1 = jnp.asarray(var, jnp.float32).reshape(-1)

    # --- Lane-dense folding: present a multiple-of-128 last dim when D is small.
    fold = 1
    if D < 128 and D % 128 != 0 and 128 % D == 0:
        k = 128 // D
        if B % k == 0:
            fold = k
    Bf, Df = B // fold, D * fold
    xf = xf32.reshape(Bf, Df)                         # contiguous reshape (free)
    mean_f = jnp.tile(mean1, (fold,)).reshape(1, Df)  # [mean | mean | ...] matches fold
    var_f = jnp.tile(var1, (fold,)).reshape(1, Df)

    # --- Batch tile selection (multiple of 8 unless it covers the full batch).
    if tile_b is None:
        tile_b = _pick_tile_b(Bf, Df)
    else:
        tile_b = min(int(tile_b), Bf)
        if tile_b != Bf:
            tile_b = max(8, (tile_b // 8) * 8)
    grid = (pl.cdiv(Bf, tile_b),)

    kernel = functools.partial(
        _normalize_clip_kernel, clip_range=float(clip_range), epsilon=float(epsilon)
    )

    out = pl.pallas_call(
        kernel,
        out_shape=jax.ShapeDtypeStruct((Bf, Df), jnp.float32),
        grid=grid,
        in_specs=[
            pl.BlockSpec((tile_b, Df), lambda i: (i, 0)),
            pl.BlockSpec((1, Df), lambda i: (0, 0)),
            pl.BlockSpec((1, Df), lambda i: (0, 0)),
        ],
        out_specs=pl.BlockSpec((tile_b, Df), lambda i: (i, 0)),
        compiler_params=pltpu.CompilerParams(
            dimension_semantics=("parallel",),
        ),
    )(xf, mean_f, var_f)

    return out.reshape(B, D).astype(out_dtype)


# TODO(synk): the running-statistics `update()` (training-mode buffer mutation) is
# stateful and outside the forward hot path; only eval-mode forward is implemented.


def _reference(x, mean, var, clip_range=10.0, epsilon=1e-8):
    return jnp.clip(
        (x - mean[None, :]) / (jnp.sqrt(var)[None, :] + epsilon),
        -clip_range,
        clip_range,
    )


if __name__ == "__main__":
    key = jax.random.PRNGKey(0)

    def run_case(batch, obs_dim, key):
        kx, = jax.random.split(key, 1)
        x = jax.random.normal(kx, (batch, obs_dim), dtype=jnp.float32) * 5.0
        # Deterministic, non-trivial buffer values (module __init__ uses zeros/ones;
        # perturb them so the normalization actually does work).
        mean = 0.1 * jnp.arange(obs_dim, dtype=jnp.float32)
        var = 1.0 + 0.05 * jnp.arange(obs_dim, dtype=jnp.float32)

        out = normalize_and_clip(x, mean, var, clip_range=10.0, epsilon=1e-8)
        out = jax.block_until_ready(out)

        ref = _reference(x, mean, var, clip_range=10.0, epsilon=1e-8)
        assert out.shape == (batch, obs_dim)
        assert jnp.allclose(out, ref, atol=1e-5, rtol=1e-5), (
            f"mismatch vs reference at batch={batch}, obs_dim={obs_dim}"
        )

    k1, k2, k3 = jax.random.split(key, 3)
    # Small case (matches module usage): folds D=32 -> lane-dense 128, single block.
    run_case(batch=8, obs_dim=32, key=k1)
    # Larger folded case: (8192, 32) -> (2048, 128), tile 1024 -> 2-step parallel grid.
    run_case(batch=8192, obs_dim=32, key=k2)
    # Non-foldable D (48): full-extent lane fallback, multi-step grid over batch.
    run_case(batch=4096, obs_dim=48, key=k3)

    print("KERNEL_OK")
</pallas_src>

<mosaic_0001>
module attributes {stable_mosaic.version = 11 : i64} {
  func.func @_normalize_clip_kernel(%arg0: i32, %arg1: memref<2x128xf32, #tpu.memory_space<vmem>>, %arg2: memref<1x128xf32, #tpu.memory_space<vmem>>, %arg3: memref<1x128xf32, #tpu.memory_space<vmem>>, %arg4: memref<2x128xf32, #tpu.memory_space<vmem>>) attributes {dimension_semantics = [#tpu.dimension_semantics<parallel>], iteration_bounds = array<i64: 1>, scalar_prefetch = 0 : i64, scratch_operands = 0 : i64, tpu.core_type = #tpu.core_type<tc>, window_params = [{transform_indices = @transform_0, window_bounds = array<i64: 2, 128>}, {pipeline_mode = #tpu.pipeline_mode<synchronous>, transform_indices = @transform_1, window_bounds = array<i64: 1, 128>}, {pipeline_mode = #tpu.pipeline_mode<synchronous>, transform_indices = @transform_2, window_bounds = array<i64: 1, 128>}, {transform_indices = @transform_3, window_bounds = array<i64: 2, 128>}]} {
    %c0 = arith.constant 0 : index
    %c0_0 = arith.constant 0 : index
    %0 = vector.load %arg1[%c0, %c0_0] : memref<2x128xf32, #tpu.memory_space<vmem>>, vector<2x128xf32>
    %c0_1 = arith.constant 0 : index
    %c0_2 = arith.constant 0 : index
    %1 = vector.load %arg2[%c0_1, %c0_2] : memref<1x128xf32, #tpu.memory_space<vmem>>, vector<1x128xf32>
    %c0_3 = arith.constant 0 : index
    %c0_4 = arith.constant 0 : index
    %2 = vector.load %arg3[%c0_3, %c0_4] : memref<1x128xf32, #tpu.memory_space<vmem>>, vector<1x128xf32>
    %3 = math.sqrt %2 : vector<1x128xf32>
    %cst = arith.constant 9.99999993E-9 : f32
    %4 = vector.broadcast %cst : f32 to vector<1x128xf32>
    %5 = arith.addf %3, %4 : vector<1x128xf32>
    %6 = tpu.reciprocal %5 : vector<1x128xf32> -> vector<1x128xf32>
    %7 = vector.broadcast %1 : vector<1x128xf32> to vector<2x128xf32>
    %8 = arith.subf %0, %7 : vector<2x128xf32>
    %9 = vector.broadcast %6 : vector<1x128xf32> to vector<2x128xf32>
    %10 = arith.mulf %8, %9 : vector<2x128xf32>
    %cst_5 = arith.constant -1.000000e+01 : f32
    %cst_6 = arith.constant 1.000000e+01 : f32
    %11 = vector.broadcast %cst_5 : f32 to vector<2x128xf32>
    %12 = arith.maximumf %11, %10 : vector<2x128xf32>
    %13 = vector.broadcast %cst_6 : f32 to vector<2x128xf32>
    %14 = arith.minimumf %13, %12 : vector<2x128xf32>
    %c0_7 = arith.constant 0 : index
    %c0_8 = arith.constant 0 : index
    %15 = vector.load %arg4[%c0_7, %c0_8] : memref<2x128xf32, #tpu.memory_space<vmem>>, vector<2x128xf32>
    tpu.vector_store %arg4[%c0_7, %c0_8], %14 {strides = array<i32>} : memref<2x128xf32, #tpu.memory_space<vmem>>, vector<2x128xf32>,
    return
  }
  func.func @transform_0(%arg0: i32) -> (i32, i32) {
    %c0_i32 = arith.constant 0 : i32
    %c0_i32_0 = arith.constant 0 : i32
    return %arg0, %c0_i32 : i32, i32
  }
  func.func @transform_1(%arg0: i32) -> (i32, i32) {
    %c0_i32 = arith.constant 0 : i32
    %c0_i32_0 = arith.constant 0 : i32
    %c0_i32_1 = arith.constant 0 : i32
    return %c0_i32, %c0_i32_0 : i32, i32
  }
  func.func @transform_2(%arg0: i32) -> (i32, i32) {
    %c0_i32 = arith.constant 0 : i32
    %c0_i32_0 = arith.constant 0 : i32
    %c0_i32_1 = arith.constant 0 : i32
    return %c0_i32, %c0_i32_0 : i32, i32
  }
  func.func @transform_3(%arg0: i32) -> (i32, i32) {
    %c0_i32 = arith.constant 0 : i32
    %c0_i32_0 = arith.constant 0 : i32
    return %arg0, %c0_i32 : i32, i32
  }
}

</mosaic_0001>

<llo_original>
// kernel: tpu_custom_call.1
$region0: #{tpu_custom_call.1}
  #allocation0 [shape = 'u32[]', space=smem, size = 0x4, offset = 0x4, fixed_abs, tag = 'smem constant byte address 0x4 - core index']
  #allocation1 [shape = 'u32[72,128]{1,0:T(1,128)}', space=vmem, size = 0x9000, scoped, tag = 'internal scratch']
  %s0 = inlined_call_operand.hbm [shape: f32[2,128], index: 0, kind: input, shape index: {}]
  %s1 = inlined_call_operand.hbm [shape: f32[1,128], index: 1, kind: input, shape index: {}]
  %s2 = inlined_call_operand.vmem [shape: f32[1,128], index: 2, kind: input, shape index: {}]
  %s3 = inlined_call_operand.hbm [shape: f32[2,128], index: 3, kind: output, shape index: {}]
  %s4 = sld [smem:[#allocation0]]
  $region30: #{tpu_custom_call.1} parent=0
    _
  %s6 = ssub.s32 1, %s4
  %s7 = scalar_select 0, %s6, %s4
  $region1: #{tpu_custom_call.1} parent=0
    #allocation2 [shape = 'u8[1024]{0}', space=vmem, size = 0x400, scoped, tag = 'input window, operand 0, single buffered']
    #allocation3 [shape = 's32[1]{0}', space=sflag, size = 0x4, scoped, tag = 'scoped memory for tpu_custom_call.1']
    #allocation4 [shape = 's32[1]{0}', space=sflag, size = 0x4, scoped, tag = 'scoped memory for tpu_custom_call.1']
    #allocation5 [shape = 'u8[512]{0}', space=vmem, size = 0x400, scoped, tag = 'input window, operand 1, single buffered']
    #allocation6 [shape = 's32[1]{0}', space=sflag, size = 0x4, scoped, tag = 'scoped memory for tpu_custom_call.1']
    #allocation7 [shape = 'u8[1024]{0}', space=vmem, size = 0x400, scoped, tag = 'output window, operand 0, single buffered']
    %8 = vsyncpa [#allocation3], 0
    %9 = vsyncpa [#allocation6], 0
    %10 = vsyncpa [#allocation4], 0
    // Predicated region
    $region2: #{tpu_custom_call.1} parent=1 // pred_check
      _
    $region3: #{tpu_custom_call.1} parent=1 // pred_check_branch
      %12 = sbr.rel (0) target = $region5
    $region4: #{tpu_custom_call.1} parent=1 // pred_region
      %14 = vsyncadd [#allocation3], 0
      %s16 = sshll.u32 %s0, 4
      %s17 = int_to_ptr.hbm [resolvable:$true] %s16
      %s18 = sshll.u32 [#allocation2], 4
      %s19 = int_to_ptr.vmem [resolvable:$true] %s18
      %21 = dma.hbm_to_vmem [thread:$0]  %s17, 32, %s19, [#allocation3]
    $region5: #{tpu_custom_call.1} parent=1 // pred_fallthru
      _
    // Predicated region
    $region6: #{tpu_custom_call.1} parent=1 // pred_check
      _
    $region7: #{tpu_custom_call.1} parent=1 // pred_check_branch
      %23 = sbr.rel (0) target = $region9
    $region8: #{tpu_custom_call.1} parent=1 // pred_region
      %25 = vsyncadd [#allocation6], 0
      %s27 = sshll.u32 %s1, 4
      %s28 = int_to_ptr.hbm [resolvable:$true] %s27
      %s29 = sshll.u32 [#allocation5], 4
      %s30 = int_to_ptr.vmem [resolvable:$true] %s29
      %32 = dma.hbm_to_vmem [thread:$0]  %s28, 16, %s30, [#allocation6]
    $region9: #{tpu_custom_call.1} parent=1 // pred_fallthru
      _
    // Predicated region
    $region10: #{tpu_custom_call.1} parent=1 // pred_check
      _
    $region11: #{tpu_custom_call.1} parent=1 // pred_check_branch
      %34 = sbr.rel (0) target = $region13
    $region12: #{tpu_custom_call.1} parent=1 // pred_region
      _
    $region13: #{tpu_custom_call.1} parent=1 // pred_fallthru
      _
    // Predicated region
    $region14: #{tpu_custom_call.1} parent=1 // pred_check
      _
    $region15: #{tpu_custom_call.1} parent=1 // pred_check_branch
      %36 = sbr.rel (0) target = $region17
    $region16: #{tpu_custom_call.1} parent=1 // pred_region
      %38 = dma.done [#allocation3], 32
    $region17: #{tpu_custom_call.1} parent=1 // pred_fallthru
      _
    // Predicated region
    $region18: #{tpu_custom_call.1} parent=1 // pred_check
      _
    $region19: #{tpu_custom_call.1} parent=1 // pred_check_branch
      %40 = sbr.rel (0) target = $region21
    $region20: #{tpu_custom_call.1} parent=1 // pred_region
      %42 = dma.done [#allocation6], 16
    $region21: #{tpu_custom_call.1} parent=1 // pred_fallthru
      _
    %v43 = vld [vmem:[#allocation2] sm:$0x3]
    %v44 = vld [vmem:[#allocation5] sm:$0x1]
    %v45 = vld [vmem:[%s2] sm:$0x1]
    %v46 = vrsqrt.pop %v45
    %v47 = vmul.f32 %v46, %v45
    %v48 = vmul.f32 %v47, %v46
    %v49 = vmul.f32 0.5, %v48
    %v50 = vsub.f32 1.5, %v49
    %v51 = vmul.f32 %v46, %v50
    %v52 = vmul.f32 %v45, %v51
    %vm53 = vcmp.eq.f32.partialorder %v45, inf
    %v54 = vsel %vm53, %v45, %v52
    %vm55 = vcmp.eq.f32.partialorder %v45, 0.0
    %v56 = vand.u32 %v45, 2147483648
    %v57 = vsel %vm55, %v56, %v54
    %v58 = vadd.f32 %v57, 1e-08
    %v59 = vrcp.pop %v58
    %v60 = vmul.f32 %v58, %v59
    %v61 = vsub.f32 1.0, %v60
    %v62 = vmul.f32 %v59, %v61
    %v63 = vadd.f32 %v59, %v62
    %vm64 = vweird.f32 %v58
    %vm65 = vweird.f32 %v59
    %vm66 = vmor %vm64, %vm65
    %v67 = vsel %vm66, %v59, %v63
    %v68 = vand.u32 2147483647, %v58
    %vm69 = vcmp.eq.f32.partialorder %v68, 8.507059e+37
    %v70 = vand.u32 %v58, 2147483648
    %v71 = vor.u32 1.1754944e-38, %v70
    %v72 = vsel %vm69, %v71, %v67
    %v74 = vperm.slane %v44, 0
    %v76 = vsub.f32 %v43, %v74
    %v78 = vperm.slane %v72, 0
    %v80 = vmul.f32 %v76, %v78
    %v81 = vmax.f32 %v80, -10.0
    %v82 = vmin.f32 %v81, 10.0
    %83 = vst [vmem:[#allocation7] sm:$0x3] %v82
    // Predicated region
    $region22: #{tpu_custom_call.1} parent=1 // pred_check
      _
    $region23: #{tpu_custom_call.1} parent=1 // pred_check_branch
      %85 = sbr.rel (0) target = $region25
    $region24: #{tpu_custom_call.1} parent=1 // pred_region
      %87 = vsyncadd [#allocation4], 0
      %s89 = sshll.u32 [#allocation7], 4
      %s90 = int_to_ptr.vmem [resolvable:$true] %s89
      %s91 = sshll.u32 %s3, 4
      %s92 = int_to_ptr.hbm [resolvable:$true] %s91
      %94 = dma.vmem_to_hbm [thread:$0]  %s90, 32, %s92, [#allocation4]
    $region25: #{tpu_custom_call.1} parent=1 // pred_fallthru
      _
    // Predicated region
    $region26: #{tpu_custom_call.1} parent=1 // pred_check
      _
    $region27: #{tpu_custom_call.1} parent=1 // pred_check_branch
      %96 = sbr.rel (0) target = $region29
    $region28: #{tpu_custom_call.1} parent=1 // pred_region
      %98 = dma.done [#allocation4], 32
    $region29: #{tpu_custom_call.1} parent=1 // pred_fallthru
      _
    %99 = vsyncpa [#allocation3], 1
    %100 = vsyncpa [#allocation6], 1
    %101 = vsyncpa [#allocation4], 1

</llo_original>
